<compile_context>
chip_gen: v7x
topology: tpu7x:2x2x1
jax: 0.10.0
libtpu: 0.0.40
codegen_flags: <defaults>
</compile_context>

<pallas_src>
import math

import jax
import jax.numpy as jnp
from jax.experimental import pallas as pl
from jax.experimental.pallas import tpu as pltpu


def _tape_kernel(x_ref, pe_ref, o_ref):
    # x_ref/o_ref: (RB, TN) block; pe_ref: (1, TN) block broadcast over the sublane dim.
    # If x is bf16 and pe is f32 the add promotes to f32; the store casts exactly once.
    o_ref[...] = (x_ref[...] + pe_ref[...]).astype(o_ref.dtype)


def make_tape_pe(d_model: int, max_len: int, scale_factor: float = 1.0,
                 dtype=jnp.float32) -> jnp.ndarray:
    """Deterministic tAPE positional-encoding table, shape (1, max_len, d_model)."""
    position = jnp.arange(0, max_len, dtype=jnp.float32)[:, None]            # (L, 1)
    div_term = jnp.exp(jnp.arange(0, d_model, 2, dtype=jnp.float32)
                       * (-math.log(10000.0) / d_model))                      # (D/2,)
    arg = position * div_term * (d_model / max_len)                           # (L, D/2)
    pe = jnp.zeros((max_len, d_model), dtype=jnp.float32)
    pe = pe.at[:, 0::2].set(jnp.sin(arg))
    pe = pe.at[:, 1::2].set(jnp.cos(arg))
    pe = (scale_factor * pe)[None, :, :]                                      # (1, L, D)
    return pe.astype(dtype)


def _sublane_multiple(itemsize: int) -> int:
    # Required sublane granularity per element width (f32: 8, bf16: 16, int8/fp8: 32).
    return {4: 8, 2: 16, 1: 32}.get(itemsize, 8)


def _round_up(v: int, m: int) -> int:
    return ((v + m - 1) // m) * m


def _tpu_budgets() -> tuple[int, int]:
    """Returns (per x/out block byte budget, scoped-VMEM limit bytes) per TPU generation."""
    kind = ""
    try:
        kind = jax.devices()[0].device_kind.lower()
    except Exception:
        pass
    if "v7" in kind:
        # 64 MiB physical VMEM, 3.2 TB/s HBM: ~6 MiB blocks keep the ~0.35 us per-step
        # overhead under ~10%; total footprint ~30-42 MiB with double buffering.
        return 6 << 20, 48 << 20
    if "v6" in kind:
        # 128 MiB physical; 4 MiB tiles sit at the top of the measured roofline curve.
        return 4 << 20, 64 << 20
    # v5e (and unknown): ~0.8 TB/s HBM — step overhead already <10% at 2 MiB blocks;
    # bigger tiles buy nothing and risk the 16 MiB scoped default, so pin the limit.
    return 2 << 20, 32 << 20


def _choose_tiles(B: int, N: int, x_itemsize: int, block_budget: int):
    """Fixed, aligned tile sizes + cdiv grid (ragged last blocks are masked by Pallas)."""
    RB = _sublane_multiple(x_itemsize)                 # sublane-aligned rows per block
    # Largest lane-aligned TN with RB * TN * itemsize <= budget, capped at N rounded to 128.
    max_elems = max(128, ((block_budget // (RB * x_itemsize)) // 128) * 128)
    TN = min(max_elems, _round_up(N, 128))
    NB = pl.cdiv(B, RB)
    nt = pl.cdiv(N, TN)
    # v7x megacore: make sure there are at least two grid tiles whenever the data allows,
    # so the second TensorCore's DMA issue capacity isn't left on the floor.
    while nt * NB < 2 and TN > 128:
        TN = max(128, ((TN // 2) // 128) * 128)
        nt = pl.cdiv(N, TN)
    return RB, TN, NB, nt


def tape_forward(x: jnp.ndarray, pe: jnp.ndarray) -> jnp.ndarray:
    """x: [B, S, D]; pe: [1, S, D] (S must equal max_len, as in the PyTorch module).

    Output dtype is x.dtype (the add itself runs in the promoted dtype inside the kernel).
    """
    B, S, D = x.shape
    assert pe.shape == (1, S, D), f"pe shape {pe.shape} incompatible with x {x.shape}"

    N = S * D
    x2 = x.reshape(B, N)                    # lane-dense last dim (S*D)
    pe2 = pe.reshape(1, N)

    block_budget, vmem_limit = _tpu_budgets()
    RB, TN, NB, nt = _choose_tiles(B, N, x.dtype.itemsize, block_budget)

    def build(pe_pipeline_mode):
        pe_kwargs = {} if pe_pipeline_mode is None else {"pipeline_mode": pe_pipeline_mode}
        return pl.pallas_call(
            _tape_kernel,
            out_shape=jax.ShapeDtypeStruct((B, N), x.dtype),
            grid_spec=pltpu.PrefetchScalarGridSpec(
                num_scalar_prefetch=0,
                # Batch blocks innermost: pe's block index is constant across them, so its
                # re-DMA is elided; nt * NB parallel slices feed v7x's two TensorCores.
                grid=(nt, NB),
                in_specs=[
                    pl.BlockSpec((RB, TN), lambda t, i: (i, t)),              # x
                    pl.BlockSpec((1, TN), lambda t, i: (0, t), **pe_kwargs),  # pe (bcast)
                ],
                out_specs=pl.BlockSpec((RB, TN), lambda t, i: (i, t)),
            ),
            compiler_params=pltpu.CompilerParams(
                dimension_semantics=("parallel", "parallel"),
                vmem_limit_bytes=vmem_limit,
            ),
        )

    # pe's (1, TN) block is sublane-padded to a full block in VMEM; since its index only
    # changes on the outer axis, single-buffering it reclaims that block. Fall back to the
    # default double buffer if this Pallas version rejects buffer_count=1.
    # TODO(synk): add input_output_aliases={0: 0} when callers can donate x.
    try:
        out2 = build(pl.Buffered(1))(x2, pe2)
    except Exception:
        out2 = build(None)(x2, pe2)

    return out2.reshape(B, S, D)


if __name__ == "__main__":
    # Small shapes consistent with the module: x is [B, S, D] with S == max_len.
    B, S, D = 2, 8, 32
    key = jax.random.PRNGKey(0)
    x = jax.random.normal(key, (B, S, D), dtype=jnp.float32)

    pe = make_tape_pe(d_model=D, max_len=S, scale_factor=1.0, dtype=jnp.float32)

    out = tape_forward(x, pe)
    jax.block_until_ready(out)

    # Sanity check against plain-JAX reference (eval-mode forward).
    ref = x + pe
    assert out.shape == (B, S, D)
    assert jnp.allclose(out, ref, atol=1e-6), "f32 mismatch vs reference"

    # bf16 path: mixed-dtype add runs in f32 inside the kernel and is stored as bf16.
    x_bf16 = x.astype(jnp.bfloat16)
    out_bf16 = tape_forward(x_bf16, pe)
    jax.block_until_ready(out_bf16)
    ref_bf16 = (x_bf16.astype(jnp.float32) + pe).astype(jnp.bfloat16)
    assert jnp.allclose(out_bf16.astype(jnp.float32),
                        ref_bf16.astype(jnp.float32), atol=1e-2), "bf16 mismatch vs reference"

    print("KERNEL_OK")
</pallas_src>

<mosaic_0001>
module attributes {stable_mosaic.version = 11 : i64} {
  func.func @_tape_kernel(%arg0: i32, %arg1: i32, %arg2: memref<8x128xf32, #tpu.memory_space<vmem>>, %arg3: memref<1x128xf32, #tpu.memory_space<vmem>>, %arg4: memref<8x128xf32, #tpu.memory_space<vmem>>) attributes {dimension_semantics = [#tpu.dimension_semantics<parallel>, #tpu.dimension_semantics<parallel>], iteration_bounds = array<i64: 2, 1>, scalar_prefetch = 0 : i64, scratch_operands = 0 : i64, tpu.core_type = #tpu.core_type<tc>, window_params = [{transform_indices = @transform_0, window_bounds = array<i64: 8, 128>}, {pipeline_mode = #tpu.pipeline_mode<synchronous>, transform_indices = @transform_1, window_bounds = array<i64: 1, 128>}, {transform_indices = @transform_2, window_bounds = array<i64: 8, 128>}]} {
    %c0 = arith.constant 0 : index
    %c0_0 = arith.constant 0 : index
    %0 = vector.load %arg2[%c0, %c0_0] : memref<8x128xf32, #tpu.memory_space<vmem>>, vector<8x128xf32>
    %c0_1 = arith.constant 0 : index
    %c0_2 = arith.constant 0 : index
    %1 = vector.load %arg3[%c0_1, %c0_2] : memref<1x128xf32, #tpu.memory_space<vmem>>, vector<1x128xf32>
    %2 = vector.broadcast %1 : vector<1x128xf32> to vector<8x128xf32>
    %3 = arith.addf %0, %2 : vector<8x128xf32>
    %c0_3 = arith.constant 0 : index
    %c0_4 = arith.constant 0 : index
    %4 = vector.load %arg4[%c0_3, %c0_4] : memref<8x128xf32, #tpu.memory_space<vmem>>, vector<8x128xf32>
    tpu.vector_store %arg4[%c0_3, %c0_4], %3 {strides = array<i32>} : memref<8x128xf32, #tpu.memory_space<vmem>>, vector<8x128xf32>,
    return
  }
  func.func @transform_0(%arg0: i32, %arg1: i32) -> (i32, i32) {
    %c0_i32 = arith.constant 0 : i32
    return %arg1, %arg0 : i32, i32
  }
  func.func @transform_1(%arg0: i32, %arg1: i32) -> (i32, i32) {
    %c0_i32 = arith.constant 0 : i32
    %c0_i32_0 = arith.constant 0 : i32
    return %c0_i32, %arg0 : i32, i32
  }
  func.func @transform_2(%arg0: i32, %arg1: i32) -> (i32, i32) {
    %c0_i32 = arith.constant 0 : i32
    return %arg1, %arg0 : i32, i32
  }
}

module attributes {stable_mosaic.version = 11 : i64} {
  func.func @_tape_kernel(%arg0: i32, %arg1: i32, %arg2: memref<8x128xf32, #tpu.memory_space<vmem>>, %arg3: memref<1x128xf32, #tpu.memory_space<vmem>>, %arg4: memref<8x128xf32, #tpu.memory_space<vmem>>) attributes {dimension_semantics = [#tpu.dimension_semantics<parallel>, #tpu.dimension_semantics<parallel>], iteration_bounds = array<i64: 2, 1>, scalar_prefetch = 0 : i64, scratch_operands = 0 : i64, tpu.core_type = #tpu.core_type<tc>, window_params = [{transform_indices = @transform_0, window_bounds = array<i64: 8, 128>}, {transform_indices = @transform_1, window_bounds = array<i64: 1, 128>}, {transform_indices = @transform_2, window_bounds = array<i64: 8, 128>}]} {
    %c0 = arith.constant 0 : index
    %c0_0 = arith.constant 0 : index
    %0 = vector.load %arg2[%c0, %c0_0] : memref<8x128xf32, #tpu.memory_space<vmem>>, vector<8x128xf32>
    %c0_1 = arith.constant 0 : index
    %c0_2 = arith.constant 0 : index
    %1 = vector.load %arg3[%c0_1, %c0_2] : memref<1x128xf32, #tpu.memory_space<vmem>>, vector<1x128xf32>
    %2 = vector.broadcast %1 : vector<1x128xf32> to vector<8x128xf32>
    %3 = arith.addf %0, %2 : vector<8x128xf32>
    %c0_3 = arith.constant 0 : index
    %c0_4 = arith.constant 0 : index
    %4 = vector.load %arg4[%c0_3, %c0_4] : memref<8x128xf32, #tpu.memory_space<vmem>>, vector<8x128xf32>
    tpu.vector_store %arg4[%c0_3, %c0_4], %3 {strides = array<i32>} : memref<8x128xf32, #tpu.memory_space<vmem>>, vector<8x128xf32>,
    return
  }
  func.func @transform_0(%arg0: i32, %arg1: i32) -> (i32, i32) {
    %c0_i32 = arith.constant 0 : i32
    return %arg1, %arg0 : i32, i32
  }
  func.func @transform_1(%arg0: i32, %arg1: i32) -> (i32, i32) {
    %c0_i32 = arith.constant 0 : i32
    %c0_i32_0 = arith.constant 0 : i32
    return %c0_i32, %arg0 : i32, i32
  }
  func.func @transform_2(%arg0: i32, %arg1: i32) -> (i32, i32) {
    %c0_i32 = arith.constant 0 : i32
    return %arg1, %arg0 : i32, i32
  }
}

</mosaic_0001>

<llo_original>
// kernel: tpu_custom_call.1
$region0: #{tpu_custom_call.1}
  #allocation0 [shape = 'u32[]', space=smem, size = 0x4, offset = 0x4, fixed_abs, tag = 'smem constant byte address 0x4 - core index']
  #allocation1 [shape = 'u32[144,128]{1,0:T(1,128)}', space=vmem, size = 0x12000, scoped, tag = 'internal scratch']
  %s0 = inlined_call_operand.hbm [shape: f32[2,256], index: 0, kind: input, shape index: {}]
  %s1 = inlined_call_operand.vmem [shape: f32[1,256], index: 1, kind: input, shape index: {}]
  %s2 = inlined_call_operand.hbm [shape: f32[2,256], index: 2, kind: output, shape index: {}]
  %s3 = sld [smem:[#allocation0]]
  $region45: #{tpu_custom_call.1} parent=0
    _
  %s5 = ssub.s32 1, %s3
  %s6 = scalar_select 0, %s5, %s3
  $region1: #{tpu_custom_call.1} parent=0
    #allocation2 [shape = 'u8[8192]{0}', space=vmem, size = 0x2000, scoped, tag = 'input window, operand 0']
    #allocation3 [shape = 's32[2]{0}', space=sflag, size = 0x8, scoped, tag = 'scoped memory for tpu_custom_call.1']
    #allocation4 [shape = 's32[2]{0}', space=sflag, size = 0x8, scoped, tag = 'scoped memory for tpu_custom_call.1']
    #allocation5 [shape = 'u8[8192]{0}', space=vmem, size = 0x2000, scoped, tag = 'output window, operand 0']
    %7 = vsyncpa [#allocation3], 0
    %s8 = scalar_lea.sflag [#allocation3], 1
    %9 = vsyncpa %s8, 0
    %10 = vsyncpa [#allocation4], 0
    %s11 = scalar_lea.sflag [#allocation4], 1
    %12 = vsyncpa %s11, 0
    loop: start=0, step=1, limit=4
    $region2: #{tpu_custom_call.1} parent=1 // loop_pre_header
      _
    $region3: #{tpu_custom_call.1} parent=1 // loop_header
      %s14 = sphi 0, %s18
      %p15 = scmp.ge.s32.totalorder %s14, 4
      %s21 = sphi 0, %s33
      %s22 = sphi 0, %s29
      %s23 = sphi 0, %s21
      %s24 = sphi 0, %s22
      %s25 = sphi 0, %s23
      %s26 = sphi 0, %s24
      %s38 = sphi 0, %s40
      %s41 = sphi 0, %s38
      %s42 = sphi 0, %s41
      %s58 = sphi 0, %s42
      %s64 = sphi 0, %s66
      %s67 = sphi 0, %s64
      %s68 = sphi 0, %s67
      %s84 = sphi 0, %s68
      %s92 = sphi 0, %s94
      %s95 = sphi 0, %s92
      %s96 = sphi 0, %s95
      %s112 = sphi 0, %s96
    $region4: #{tpu_custom_call.1} parent=1 // loop_header_branch
      %17 = sbr.rel (%p15) target = $region8
    $region5: #{tpu_custom_call.1} parent=1 // loop_body
      %s19 = ssub.s32 %s14, 1
      %s20 = ssub.s32 %s14, 2
      %s27 = sadd.s32 1, %s22
      %p28 = scmp.ge.s32.totalorder %s27, 1
      %s29 = scalar_select %p28, 0, %s27
      %s30 = sadd.s32 1, %s21
      %s31 = scalar_select %p28, %s30, %s21
      %p32 = scmp.ge.s32.totalorder %s31, 2
      %s33 = scalar_select %p32, 0, %s31
      %s34 = ssub.s32 %s22, %s29
      %s35 = ssub.s32 %s21, %s33
      %s36 = sor.u32 %s34, %s35
      %p37 = scmp.eq.s32.totalorder %s36, 0
      %s39 = sadd.s32 %s38, 1
      %s40 = scalar_select %p37, %s38, %s39
      %p43 = pneg %p37
      %p44 = scmp.eq.s32.totalorder %s14, 1
      %p45 = por %p43, %p44
      %p46 = scmp.ne.s32.totalorder %s38, %s41
      %p47 = scmp.eq.s32.totalorder %s14, 0
      %p48 = por %p46, %p47
      %p49 = scmp.ne.s32.totalorder %s38, %s41
      %p50 = scmp.eq.s32.totalorder %s19, 1
      %p51 = por %p49, %p50
      %p52 = scmp.ne.s32.totalorder %s41, %s42
      %p53 = scmp.eq.s32.totalorder %s19, 0
      %p54 = por %p52, %p53
      %p55 = scmp.ne.s32.totalorder %s41, %s42
      %p56 = scmp.eq.s32.totalorder %s20, 1
      %p57 = por %p55, %p56
      %p59 = scmp.ne.s32.totalorder %s42, %s58
      %p60 = scmp.eq.s32.totalorder %s20, 0
      %p61 = por %p59, %p60
      %s62 = ssub.s32 %s21, %s33
      %p63 = scmp.eq.s32.totalorder %s62, 0
      %s65 = sadd.s32 %s64, 1
      %s66 = scalar_select %p63, %s64, %s65
      %p69 = pneg %p63
      %p70 = scmp.eq.s32.totalorder %s14, 1
      %p71 = por %p69, %p70
      %p72 = scmp.ne.s32.totalorder %s64, %s67
      %p73 = scmp.eq.s32.totalorder %s14, 0
      %p74 = por %p72, %p73
      %p75 = scmp.ne.s32.totalorder %s64, %s67
      %p76 = scmp.eq.s32.totalorder %s19, 1
      %p77 = por %p75, %p76
      %p78 = scmp.ne.s32.totalorder %s67, %s68
      %p79 = scmp.eq.s32.totalorder %s19, 0
      %p80 = por %p78, %p79
      %p81 = scmp.ne.s32.totalorder %s67, %s68
      %p82 = scmp.eq.s32.totalorder %s20, 1
      %p83 = por %p81, %p82
      %p85 = scmp.ne.s32.totalorder %s68, %s84
      %p86 = scmp.eq.s32.totalorder %s20, 0
      %p87 = por %p85, %p86
      %s88 = ssub.s32 %s22, %s29
      %s89 = ssub.s32 %s21, %s33
      %s90 = sor.u32 %s88, %s89
      %p91 = scmp.eq.s32.totalorder %s90, 0
      %s93 = sadd.s32 %s92, 1
      %s94 = scalar_select %p91, %s92, %s93
      %p97 = pneg %p91
      %p98 = scmp.eq.s32.totalorder %s14, 1
      %p99 = por %p97, %p98
      %p100 = scmp.ne.s32.totalorder %s92, %s95
      %p101 = scmp.eq.s32.totalorder %s14, 0
      %p102 = por %p100, %p101
      %p103 = scmp.ne.s32.totalorder %s92, %s95
      %p104 = scmp.eq.s32.totalorder %s19, 1
      %p105 = por %p103, %p104
      %p106 = scmp.ne.s32.totalorder %s95, %s96
      %p107 = scmp.eq.s32.totalorder %s19, 0
      %p108 = por %p106, %p107
      %p109 = scmp.ne.s32.totalorder %s95, %s96
      %p110 = scmp.eq.s32.totalorder %s20, 1
      %p111 = por %p109, %p110
      %p113 = scmp.ne.s32.totalorder %s96, %s112
      %p114 = scmp.eq.s32.totalorder %s20, 0
      %p115 = por %p113, %p114
      %p116 = scmp.le.s32.totalorder 1, %s14
      %p117 = scmp.lt.s32.totalorder %s14, 3
      %p118 = pnand %p116, %p117
      %p119 = pneg %p118
      // Predicated region
      $region9: #{tpu_custom_call.1} parent=5 // pred_check
        _
      $region10: #{tpu_custom_call.1} parent=5 // pred_check_branch
        %121 = sbr.rel (%p118) target = $region12
      $region11: #{tpu_custom_call.1} parent=5 // pred_region
        %s122 = ssub.s32 %s14, 1
        // Predicated region
        $region13: #{tpu_custom_call.1} parent=11 // pred_check
          %p123 = pneg %p80
        $region14: #{tpu_custom_call.1} parent=11 // pred_check_branch
          %125 = sbr.rel (%p123) target = $region16
        $region15: #{tpu_custom_call.1} parent=11 // pred_region
          %p126 = scmp.lt.s32.totalorder %s23, 1
          %s127 = scalar_select %p126, %s23, 1
          %s128 = scalar_lea.vmem %s1, %s127
        $region16: #{tpu_custom_call.1} parent=11 // pred_fallthru
          _
      $region12: #{tpu_custom_call.1} parent=5 // pred_fallthru
        _
      %p129 = scmp.lt.s32.totalorder %s14, 2
      // Predicated region
      $region17: #{tpu_custom_call.1} parent=5 // pred_check
        %p130 = pneg %p129
      $region18: #{tpu_custom_call.1} parent=5 // pred_check_branch
        %132 = sbr.rel (%p130) target = $region20
      $region19: #{tpu_custom_call.1} parent=5 // pred_region
        // Predicated region
        $region21: #{tpu_custom_call.1} parent=19 // pred_check
          %p133 = pneg %p48
        $region22: #{tpu_custom_call.1} parent=19 // pred_check_branch
          %135 = sbr.rel (%p133) target = $region24
        $region23: #{tpu_custom_call.1} parent=19 // pred_region
          %s136 = sand.u32 %s38, 1
          %s137 = scalar_lea.sflag [#allocation3], %s136
          %s138 = sand.u32 %s38, 1
          %s139 = smul.addr %s138, 8
          %s140 = scalar_lea.vmem [#allocation2], %s139
          %s141 = smul.u32 4, %s22
          %s142 = ssub.s32 1, %s141
          %s143 = smul.u32 32, %s142
          %s145 = ssub.s32 128, %s143
          %146 = vsyncadd %s137, %s145
          %p147 = scmp.ne.s32.totalorder 0, %s143
          %s148 = smul.addr %s141, 2
          %s149 = sadd.s32 %s21, %s148
          %s150 = smul.addr %s149, 32
          %s151 = scalar_lea.hbm %s0, %s150
          %s152 = smul.u32 2, %s142
          %s153 = sshll.u32 %s140, 4
          %s154 = int_to_ptr.vmem [resolvable:$true] %s153
          %s155 = sshll.u32 %s152, 4
          %159 = dma.hbm_to_vmem [thread:$0]  (%p147), %s151, %s155, %s154, %s137, 64, 32, 2
        $region24: #{tpu_custom_call.1} parent=19 // pred_fallthru
          _
      $region20: #{tpu_custom_call.1} parent=5 // pred_fallthru
        _
      %p160 = scmp.le.s32.totalorder 1, %s14
      %p161 = scmp.lt.s32.totalorder %s14, 3
      %p162 = pnand %p160, %p161
      %p163 = pneg %p162
      // Predicated region
      $region25: #{tpu_custom_call.1} parent=5 // pred_check
        _
      $region26: #{tpu_custom_call.1} parent=5 // pred_check_branch
        %165 = sbr.rel (%p162) target = $region28
      $region27: #{tpu_custom_call.1} parent=5 // pred_region
        %s166 = ssub.s32 %s14, 1
        %s167 = sand.u32 %s41, 1
        %s168 = scalar_lea.sflag [#allocation3], %s167
        %s169 = sand.u32 %s41, 1
        %s170 = smul.addr %s169, 8
        %s171 = scalar_lea.vmem [#allocation2], %s170
        // Predicated region
        $region29: #{tpu_custom_call.1} parent=27 // pred_check
          %p172 = pneg %p54
        $region30: #{tpu_custom_call.1} parent=27 // pred_check_branch
          %174 = sbr.rel (%p172) target = $region32
        $region31: #{tpu_custom_call.1} parent=27 // pred_region
          %175 = dma.done %s168, 128
        $region32: #{tpu_custom_call.1} parent=27 // pred_fallthru
          _
        %s176 = sand.u32 %s41, 1
        %s177 = scalar_lea.sflag [#allocation3], %s176
        %s178 = sand.u32 %s41, 1
        %s179 = smul.addr %s178, 8
        %s180 = scalar_lea.vmem [#allocation2], %s179
        %p181 = pneg %p54
        %p182 = pneg %p51
        %p183 = scmp.lt.s32.totalorder %s23, 1
        %s184 = scalar_select %p183, %s23, 1
        %s185 = scalar_lea.vmem %s1, %s184
        %p186 = pneg %p80
        %p187 = pneg %p77
        %p188 = pneg %p108
        %p189 = pneg %p105
        %s190 = sand.u32 %s95, 1
        %s191 = scalar_lea.sflag [#allocation4], %s190
        %s192 = sand.u32 %s95, 1
        %s193 = smul.addr %s192, 8
        %s194 = scalar_lea.vmem [#allocation5], %s193
        %s195 = smul.u32 4, %s24
        %s196 = ssub.s32 1, %s195
        %s197 = smul.u32 32, %s196
        %p198 = scmp.lt.s32.totalorder %s23, 1
        %s199 = scalar_select %p198, %s23, 1
        %s200 = scalar_lea.vmem %s1, %s199
        %s201 = smul.u32 4, %s24
        %s202 = ssub.s32 1, %s201
        %s203 = smul.u32 32, %s202
        %v204 = vld [vmem:[%s171] sm:$0xff]
        %v205 = vld [vmem:[%s200] sm:$0x1]
        %v207 = vlaneseq
        %v208 = vshrl.u32 %v207, 7
        %v209 = vsub.s32 0, %v208
        %v210 = vrot.slane %v205, %v209
        %v212 = vadd.f32 %v204, %v210
        %213 = vst [vmem:[%s194] sm:$0xff] %v212
        %s214 = sand.u32 %s95, 1
        %s215 = scalar_lea.sflag [#allocation4], %s214
        %s216 = sand.u32 %s95, 1
        %s217 = smul.addr %s216, 8
        %s218 = scalar_lea.vmem [#allocation5], %s217
        // Predicated region
        $region33: #{tpu_custom_call.1} parent=27 // pred_check
          %p219 = pneg %p105
        $region34: #{tpu_custom_call.1} parent=27 // pred_check_branch
          %221 = sbr.rel (%p219) target = $region36
        $region35: #{tpu_custom_call.1} parent=27 // pred_region
          %s222 = smul.u32 4, %s24
          %s223 = ssub.s32 1, %s222
          %s224 = smul.u32 32, %s223
          %s226 = ssub.s32 128, %s224
          %227 = vsyncadd %s215, %s226
          %p228 = scmp.ne.s32.totalorder 0, %s224
          %s229 = smul.addr %s222, 2
          %s230 = sadd.s32 %s23, %s229
          %s231 = smul.addr %s230, 32
          %s232 = scalar_lea.hbm %s2, %s231
          %s233 = smul.u32 2, %s223
          %s234 = sshll.u32 %s218, 4
          %s235 = int_to_ptr.vmem [resolvable:$true] %s234
          %s236 = sshll.u32 %s233, 4
          %240 = dma.vmem_to_hbm [thread:$0]  (%p228), %s235, %s236, %s232, %s215, 32, 64, 2
        $region36: #{tpu_custom_call.1} parent=27 // pred_fallthru
          _
      $region28: #{tpu_custom_call.1} parent=5 // pred_fallthru
        _
      %p241 = scmp.le.s32.totalorder 2, %s14
      // Predicated region
      $region37: #{tpu_custom_call.1} parent=5 // pred_check
        %p242 = pneg %p241
      $region38: #{tpu_custom_call.1} parent=5 // pred_check_branch
        %244 = sbr.rel (%p242) target = $region40
      $region39: #{tpu_custom_call.1} parent=5 // pred_region
        %s245 = ssub.s32 %s14, 2
        // Predicated region
        $region41: #{tpu_custom_call.1} parent=39 // pred_check
          %p246 = pneg %p111
        $region42: #{tpu_custom_call.1} parent=39 // pred_check_branch
          %248 = sbr.rel (%p246) target = $region44
        $region43: #{tpu_custom_call.1} parent=39 // pred_region
          %s249 = sand.u32 %s96, 1
          %s250 = scalar_lea.sflag [#allocation4], %s249
          %s251 = sand.u32 %s96, 1
          %s252 = smul.addr %s251, 8
          %s253 = scalar_lea.vmem [#allocation5], %s252
          %254 = dma.done %s250, 128
        $region44: #{tpu_custom_call.1} parent=39 // pred_fallthru
          _
      $region40: #{tpu_custom_call.1} parent=5 // pred_fallthru
        _
    $region6: #{tpu_custom_call.1} parent=1 // loop_footer
      %s18 = sadd.s32 1, %s14
    $region7: #{tpu_custom_call.1} parent=1 // loop_footer_branch
      %13 = sbr.rel target = $region3
    $region8: #{tpu_custom_call.1} parent=1 // loop_exit
      _
    %255 = vsyncpa [#allocation3], 1
    %s256 = scalar_lea.sflag [#allocation3], 1
    %257 = vsyncpa %s256, 1
    %258 = vsyncpa [#allocation4], 1
    %s259 = scalar_lea.sflag [#allocation4], 1
    %260 = vsyncpa %s259, 1

// kernel: tpu_custom_call.1
$region0: #{tpu_custom_call.1}
  #allocation0 [shape = 'u32[]', space=smem, size = 0x4, offset = 0x4, fixed_abs, tag = 'smem constant byte address 0x4 - core index']
  #allocation1 [shape = 'u32[144,128]{1,0:T(1,128)}', space=vmem, size = 0x12000, scoped, tag = 'internal scratch']
  %s0 = inlined_call_operand.hbm [shape: f32[2,256], index: 0, kind: input, shape index: {}]
  %s1 = inlined_call_operand.vmem [shape: f32[1,256], index: 1, kind: input, shape index: {}]
  %s2 = inlined_call_operand.hbm [shape: f32[2,256], index: 2, kind: output, shape index: {}]
  %s3 = sld [smem:[#allocation0]]
  $region45: #{tpu_custom_call.1} parent=0
    _
  %s5 = ssub.s32 1, %s3
  %s6 = scalar_select 0, %s5, %s3
  $region1: #{tpu_custom_call.1} parent=0
    #allocation2 [shape = 'u8[8192]{0}', space=vmem, size = 0x2000, scoped, tag = 'input window, operand 0']
    #allocation3 [shape = 's32[2]{0}', space=sflag, size = 0x8, scoped, tag = 'scoped memory for tpu_custom_call.1']
    #allocation4 [shape = 's32[2]{0}', space=sflag, size = 0x8, scoped, tag = 'scoped memory for tpu_custom_call.1']
    #allocation5 [shape = 'u8[8192]{0}', space=vmem, size = 0x2000, scoped, tag = 'output window, operand 0']
    %7 = vsyncpa [#allocation3], 0
    %s8 = scalar_lea.sflag [#allocation3], 1
    %9 = vsyncpa %s8, 0
    %10 = vsyncpa [#allocation4], 0
    %s11 = scalar_lea.sflag [#allocation4], 1
    %12 = vsyncpa %s11, 0
    loop: start=0, step=1, limit=4
    $region2: #{tpu_custom_call.1} parent=1 // loop_pre_header
      _
    $region3: #{tpu_custom_call.1} parent=1 // loop_header
      %s14 = sphi 0, %s18
      %p15 = scmp.ge.s32.totalorder %s14, 4
      %s21 = sphi 0, %s33
      %s22 = sphi 0, %s29
      %s23 = sphi 0, %s21
      %s24 = sphi 0, %s22
      %s25 = sphi 0, %s23
      %s26 = sphi 0, %s24
      %s38 = sphi 0, %s40
      %s41 = sphi 0, %s38
      %s42 = sphi 0, %s41
      %s58 = sphi 0, %s42
      %s64 = sphi 0, %s66
      %s67 = sphi 0, %s64
      %s68 = sphi 0, %s67
      %s84 = sphi 0, %s68
      %s92 = sphi 0, %s94
      %s95 = sphi 0, %s92
      %s96 = sphi 0, %s95
      %s112 = sphi 0, %s96
    $region4: #{tpu_custom_call.1} parent=1 // loop_header_branch
      %17 = sbr.rel (%p15) target = $region8
    $region5: #{tpu_custom_call.1} parent=1 // loop_body
      %s19 = ssub.s32 %s14, 1
      %s20 = ssub.s32 %s14, 2
      %s27 = sadd.s32 1, %s22
      %p28 = scmp.ge.s32.totalorder %s27, 1
      %s29 = scalar_select %p28, 0, %s27
      %s30 = sadd.s32 1, %s21
      %s31 = scalar_select %p28, %s30, %s21
      %p32 = scmp.ge.s32.totalorder %s31, 2
      %s33 = scalar_select %p32, 0, %s31
      %s34 = ssub.s32 %s22, %s29
      %s35 = ssub.s32 %s21, %s33
      %s36 = sor.u32 %s34, %s35
      %p37 = scmp.eq.s32.totalorder %s36, 0
      %s39 = sadd.s32 %s38, 1
      %s40 = scalar_select %p37, %s38, %s39
      %p43 = pneg %p37
      %p44 = scmp.eq.s32.totalorder %s14, 1
      %p45 = por %p43, %p44
      %p46 = scmp.ne.s32.totalorder %s38, %s41
      %p47 = scmp.eq.s32.totalorder %s14, 0
      %p48 = por %p46, %p47
      %p49 = scmp.ne.s32.totalorder %s38, %s41
      %p50 = scmp.eq.s32.totalorder %s19, 1
      %p51 = por %p49, %p50
      %p52 = scmp.ne.s32.totalorder %s41, %s42
      %p53 = scmp.eq.s32.totalorder %s19, 0
      %p54 = por %p52, %p53
      %p55 = scmp.ne.s32.totalorder %s41, %s42
      %p56 = scmp.eq.s32.totalorder %s20, 1
      %p57 = por %p55, %p56
      %p59 = scmp.ne.s32.totalorder %s42, %s58
      %p60 = scmp.eq.s32.totalorder %s20, 0
      %p61 = por %p59, %p60
      %s62 = ssub.s32 %s21, %s33
      %p63 = scmp.eq.s32.totalorder %s62, 0
      %s65 = sadd.s32 %s64, 1
      %s66 = scalar_select %p63, %s64, %s65
      %p69 = pneg %p63
      %p70 = scmp.eq.s32.totalorder %s14, 1
      %p71 = por %p69, %p70
      %p72 = scmp.ne.s32.totalorder %s64, %s67
      %p73 = scmp.eq.s32.totalorder %s14, 0
      %p74 = por %p72, %p73
      %p75 = scmp.ne.s32.totalorder %s64, %s67
      %p76 = scmp.eq.s32.totalorder %s19, 1
      %p77 = por %p75, %p76
      %p78 = scmp.ne.s32.totalorder %s67, %s68
      %p79 = scmp.eq.s32.totalorder %s19, 0
      %p80 = por %p78, %p79
      %p81 = scmp.ne.s32.totalorder %s67, %s68
      %p82 = scmp.eq.s32.totalorder %s20, 1
      %p83 = por %p81, %p82
      %p85 = scmp.ne.s32.totalorder %s68, %s84
      %p86 = scmp.eq.s32.totalorder %s20, 0
      %p87 = por %p85, %p86
      %s88 = ssub.s32 %s22, %s29
      %s89 = ssub.s32 %s21, %s33
      %s90 = sor.u32 %s88, %s89
      %p91 = scmp.eq.s32.totalorder %s90, 0
      %s93 = sadd.s32 %s92, 1
      %s94 = scalar_select %p91, %s92, %s93
      %p97 = pneg %p91
      %p98 = scmp.eq.s32.totalorder %s14, 1
      %p99 = por %p97, %p98
      %p100 = scmp.ne.s32.totalorder %s92, %s95
      %p101 = scmp.eq.s32.totalorder %s14, 0
      %p102 = por %p100, %p101
      %p103 = scmp.ne.s32.totalorder %s92, %s95
      %p104 = scmp.eq.s32.totalorder %s19, 1
      %p105 = por %p103, %p104
      %p106 = scmp.ne.s32.totalorder %s95, %s96
      %p107 = scmp.eq.s32.totalorder %s19, 0
      %p108 = por %p106, %p107
      %p109 = scmp.ne.s32.totalorder %s95, %s96
      %p110 = scmp.eq.s32.totalorder %s20, 1
      %p111 = por %p109, %p110
      %p113 = scmp.ne.s32.totalorder %s96, %s112
      %p114 = scmp.eq.s32.totalorder %s20, 0
      %p115 = por %p113, %p114
      %p116 = scmp.le.s32.totalorder 1, %s14
      %p117 = scmp.lt.s32.totalorder %s14, 3
      %p118 = pnand %p116, %p117
      %p119 = pneg %p118
      // Predicated region
      $region9: #{tpu_custom_call.1} parent=5 // pred_check
        _
      $region10: #{tpu_custom_call.1} parent=5 // pred_check_branch
        %121 = sbr.rel (%p118) target = $region12
      $region11: #{tpu_custom_call.1} parent=5 // pred_region
        %s122 = ssub.s32 %s14, 1
      $region12: #{tpu_custom_call.1} parent=5 // pred_fallthru
        _
      %p123 = scmp.lt.s32.totalorder %s14, 2
      // Predicated region
      $region13: #{tpu_custom_call.1} parent=5 // pred_check
        %p124 = pneg %p123
      $region14: #{tpu_custom_call.1} parent=5 // pred_check_branch
        %126 = sbr.rel (%p124) target = $region16
      $region15: #{tpu_custom_call.1} parent=5 // pred_region
        // Predicated region
        $region17: #{tpu_custom_call.1} parent=15 // pred_check
          %p127 = pneg %p48
        $region18: #{tpu_custom_call.1} parent=15 // pred_check_branch
          %129 = sbr.rel (%p127) target = $region20
        $region19: #{tpu_custom_call.1} parent=15 // pred_region
          %s130 = sand.u32 %s38, 1
          %s131 = scalar_lea.sflag [#allocation3], %s130
          %s132 = sand.u32 %s38, 1
          %s133 = smul.addr %s132, 8
          %s134 = scalar_lea.vmem [#allocation2], %s133
          %s135 = smul.u32 4, %s22
          %s136 = ssub.s32 1, %s135
          %s137 = smul.u32 32, %s136
          %s139 = ssub.s32 128, %s137
          %140 = vsyncadd %s131, %s139
          %p141 = scmp.ne.s32.totalorder 0, %s137
          %s142 = smul.addr %s135, 2
          %s143 = sadd.s32 %s21, %s142
          %s144 = smul.addr %s143, 32
          %s145 = scalar_lea.hbm %s0, %s144
          %s146 = smul.u32 2, %s136
          %s147 = sshll.u32 %s134, 4
          %s148 = int_to_ptr.vmem [resolvable:$true] %s147
          %s149 = sshll.u32 %s146, 4
          %153 = dma.hbm_to_vmem [thread:$0]  (%p141), %s145, %s149, %s148, %s131, 64, 32, 2
        $region20: #{tpu_custom_call.1} parent=15 // pred_fallthru
          _
        // Predicated region
        $region21: #{tpu_custom_call.1} parent=15 // pred_check
          %p154 = pneg %p74
        $region22: #{tpu_custom_call.1} parent=15 // pred_check_branch
          %156 = sbr.rel (%p154) target = $region24
        $region23: #{tpu_custom_call.1} parent=15 // pred_region
          %p157 = scmp.lt.s32.totalorder %s21, 1
          %s158 = scalar_select %p157, %s21, 1
          %s159 = scalar_lea.vmem %s1, %s158
        $region24: #{tpu_custom_call.1} parent=15 // pred_fallthru
          _
      $region16: #{tpu_custom_call.1} parent=5 // pred_fallthru
        _
      %p160 = scmp.le.s32.totalorder 1, %s14
      %p161 = scmp.lt.s32.totalorder %s14, 3
      %p162 = pnand %p160, %p161
      %p163 = pneg %p162
      // Predicated region
      $region25: #{tpu_custom_call.1} parent=5 // pred_check
        _
      $region26: #{tpu_custom_call.1} parent=5 // pred_check_branch
        %165 = sbr.rel (%p162) target = $region28
      $region27: #{tpu_custom_call.1} parent=5 // pred_region
        %s166 = ssub.s32 %s14, 1
        %s167 = sand.u32 %s41, 1
        %s168 = scalar_lea.sflag [#allocation3], %s167
        %s169 = sand.u32 %s41, 1
        %s170 = smul.addr %s169, 8
        %s171 = scalar_lea.vmem [#allocation2], %s170
        // Predicated region
        $region29: #{tpu_custom_call.1} parent=27 // pred_check
          %p172 = pneg %p54
        $region30: #{tpu_custom_call.1} parent=27 // pred_check_branch
          %174 = sbr.rel (%p172) target = $region32
        $region31: #{tpu_custom_call.1} parent=27 // pred_region
          %175 = dma.done %s168, 128
        $region32: #{tpu_custom_call.1} parent=27 // pred_fallthru
          _
        %s176 = sand.u32 %s41, 1
        %s177 = scalar_lea.sflag [#allocation3], %s176
        %s178 = sand.u32 %s41, 1
        %s179 = smul.addr %s178, 8
        %s180 = scalar_lea.vmem [#allocation2], %s179
        %p181 = pneg %p54
        %p182 = pneg %p51
        %p183 = scmp.lt.s32.totalorder %s23, 1
        %s184 = scalar_select %p183, %s23, 1
        %s185 = scalar_lea.vmem %s1, %s184
        %p186 = pneg %p80
        %p187 = pneg %p77
        %p188 = pneg %p108
        %p189 = pneg %p105
        %s190 = sand.u32 %s95, 1
        %s191 = scalar_lea.sflag [#allocation4], %s190
        %s192 = sand.u32 %s95, 1
        %s193 = smul.addr %s192, 8
        %s194 = scalar_lea.vmem [#allocation5], %s193
        %s195 = smul.u32 4, %s24
        %s196 = ssub.s32 1, %s195
        %s197 = smul.u32 32, %s196
        %p198 = scmp.lt.s32.totalorder %s23, 1
        %s199 = scalar_select %p198, %s23, 1
        %s200 = scalar_lea.vmem %s1, %s199
        %s201 = smul.u32 4, %s24
        %s202 = ssub.s32 1, %s201
        %s203 = smul.u32 32, %s202
        %v204 = vld [vmem:[%s171] sm:$0xff]
        %v205 = vld [vmem:[%s200] sm:$0x1]
        %v207 = vlaneseq
        %v208 = vshrl.u32 %v207, 7
        %v209 = vsub.s32 0, %v208
        %v210 = vrot.slane %v205, %v209
        %v212 = vadd.f32 %v204, %v210
        %213 = vst [vmem:[%s194] sm:$0xff] %v212
        %s214 = sand.u32 %s95, 1
        %s215 = scalar_lea.sflag [#allocation4], %s214
        %s216 = sand.u32 %s95, 1
        %s217 = smul.addr %s216, 8
        %s218 = scalar_lea.vmem [#allocation5], %s217
        // Predicated region
        $region33: #{tpu_custom_call.1} parent=27 // pred_check
          %p219 = pneg %p105
        $region34: #{tpu_custom_call.1} parent=27 // pred_check_branch
          %221 = sbr.rel (%p219) target = $region36
        $region35: #{tpu_custom_call.1} parent=27 // pred_region
          %s222 = smul.u32 4, %s24
          %s223 = ssub.s32 1, %s222
          %s224 = smul.u32 32, %s223
          %s226 = ssub.s32 128, %s224
          %227 = vsyncadd %s215, %s226
          %p228 = scmp.ne.s32.totalorder 0, %s224
          %s229 = smul.addr %s222, 2
          %s230 = sadd.s32 %s23, %s229
          %s231 = smul.addr %s230, 32
          %s232 = scalar_lea.hbm %s2, %s231
          %s233 = smul.u32 2, %s223
          %s234 = sshll.u32 %s218, 4
          %s235 = int_to_ptr.vmem [resolvable:$true] %s234
          %s236 = sshll.u32 %s233, 4
          %240 = dma.vmem_to_hbm [thread:$0]  (%p228), %s235, %s236, %s232, %s215, 32, 64, 2
        $region36: #{tpu_custom_call.1} parent=27 // pred_fallthru
          _
      $region28: #{tpu_custom_call.1} parent=5 // pred_fallthru
        _
      %p241 = scmp.le.s32.totalorder 2, %s14
      // Predicated region
      $region37: #{tpu_custom_call.1} parent=5 // pred_check
        %p242 = pneg %p241
      $region38: #{tpu_custom_call.1} parent=5 // pred_check_branch
        %244 = sbr.rel (%p242) target = $region40
      $region39: #{tpu_custom_call.1} parent=5 // pred_region
        %s245 = ssub.s32 %s14, 2
        // Predicated region
        $region41: #{tpu_custom_call.1} parent=39 // pred_check
          %p246 = pneg %p111
        $region42: #{tpu_custom_call.1} parent=39 // pred_check_branch
          %248 = sbr.rel (%p246) target = $region44
        $region43: #{tpu_custom_call.1} parent=39 // pred_region
          %s249 = sand.u32 %s96, 1
          %s250 = scalar_lea.sflag [#allocation4], %s249
          %s251 = sand.u32 %s96, 1
          %s252 = smul.addr %s251, 8
          %s253 = scalar_lea.vmem [#allocation5], %s252
          %254 = dma.done %s250, 128
        $region44: #{tpu_custom_call.1} parent=39 // pred_fallthru
          _
      $region40: #{tpu_custom_call.1} parent=5 // pred_fallthru
        _
    $region6: #{tpu_custom_call.1} parent=1 // loop_footer
      %s18 = sadd.s32 1, %s14
    $region7: #{tpu_custom_call.1} parent=1 // loop_footer_branch
      %13 = sbr.rel target = $region3
    $region8: #{tpu_custom_call.1} parent=1 // loop_exit
      _
    %255 = vsyncpa [#allocation3], 1
    %s256 = scalar_lea.sflag [#allocation3], 1
    %257 = vsyncpa %s256, 1
    %258 = vsyncpa [#allocation4], 1
    %s259 = scalar_lea.sflag [#allocation4], 1
    %260 = vsyncpa %s259, 1

</llo_original>
